<compile_context>
chip_gen: v6e
topology: v6e:2x2x1
jax: 0.10.0
libtpu: 0.0.40
codegen_flags: <defaults>
</compile_context>

<pallas_src>
import math

import jax
import jax.numpy as jnp
from jax.experimental import pallas as pl
from jax.experimental.pallas import tpu as pltpu


def _pe_kernel(sp_ref, out_ref):
    # sp_ref  : (2, dim) f32 -- row 0: scale (div_term duplicated per sin/cos lane pair)
    #                           row 1: phase (0 on even lanes, pi/2 on odd lanes)
    # out_ref : (tile_rows, dim) f32
    rows = out_ref.shape[0]
    base = pl.program_id(0) * rows
    pos = (jax.lax.broadcasted_iota(jnp.int32, out_ref.shape, 0) + base).astype(jnp.float32)
    # Single sin over the whole tile; odd lanes carry a pi/2 phase shift -> cos.
    out_ref[...] = jnp.sin(pos * sp_ref[0:1, :] + sp_ref[1:2, :])


def _round_up(x: int, m: int) -> int:
    return ((x + m - 1) // m) * m


def _pick_tile_rows(x_len: int, dim: int, target_bytes: int = 4 * 1024 * 1024) -> int:
    # Keep each f32 output block <= ~4 MiB (safe for v7x's 64 MiB VMEM / 32 MiB scoped
    # default with double-buffering), <= 512 rows, multiple of 8 sublanes.
    rows_for_budget = max(8, (target_bytes // (dim * 4)) // 8 * 8)
    return int(min(512, rows_for_budget, _round_up(x_len, 8)))


def make_positional_encoding(dim: int, max_len: int):
    """Build the (2, dim) scale/phase buffer once (hoisted out of forward).

    scale[j] = div_term[j // 2]
    phase[j] = 0 if j even else pi/2   (sin(x + pi/2) == cos(x))
    """
    assert dim % 2 == 0, "dim must be even"
    del max_len  # positions are generated in-kernel; kept for API parity with PyTorch
    div_term = jnp.exp(
        jnp.arange(0, dim, 2, dtype=jnp.float32) * (-math.log(10000.0) / dim)
    )  # (dim//2,)
    scale = jnp.repeat(div_term, 2)  # (dim,)
    phase = jnp.tile(jnp.array([0.0, math.pi / 2.0], dtype=jnp.float32), dim // 2)  # (dim,)
    return jnp.stack([scale, phase], axis=0).astype(jnp.float32)  # (2, dim)


def positional_encoding_forward(scale_phase, x_len: int):
    """Pallas forward. x_len must be a static Python int (shapes are static in JAX)."""
    dim = int(scale_phase.shape[1])
    tr = _pick_tile_rows(x_len, dim)
    padded_len = _round_up(x_len, tr)
    grid = (padded_len // tr,)

    pe_2d = pl.pallas_call(
        _pe_kernel,
        out_shape=jax.ShapeDtypeStruct((padded_len, dim), jnp.float32),
        grid_spec=pltpu.PrefetchScalarGridSpec(
            num_scalar_prefetch=0,
            grid=grid,
            in_specs=[pl.BlockSpec((2, dim), lambda i: (0, 0))],
            out_specs=pl.BlockSpec((tr, dim), lambda i: (i, 0)),
        ),
        compiler_params=pltpu.CompilerParams(
            dimension_semantics=("parallel",),
        ),
    )(scale_phase)

    return pe_2d[:x_len].reshape(1, x_len, dim)


def _reference(dim: int, x_len: int):
    """Direct port of the PyTorch forward (dual sin/cos + stack + reshape)."""
    position = jnp.arange(x_len, dtype=jnp.float32).reshape(x_len, 1)
    div_term = jnp.exp(
        jnp.arange(0, dim, 2, dtype=jnp.float32) * (-math.log(10000.0) / dim)
    )
    angle = position * div_term  # (x_len, dim//2)
    pe = jnp.stack([jnp.sin(angle), jnp.cos(angle)], axis=2)  # (x_len, dim//2, 2)
    return pe.reshape(1, x_len, -1)


if __name__ == "__main__":
    dim = 32
    max_len = 64
    x_len = 8

    _ = jax.random.PRNGKey(0)  # buffers are deterministic; key kept for convention
    scale_phase = make_positional_encoding(dim, max_len)

    pe = positional_encoding_forward(scale_phase, x_len)
    pe = jax.block_until_ready(pe)

    ref = _reference(dim, x_len)
    assert pe.shape == (1, x_len, dim), pe.shape
    assert jnp.allclose(pe, ref, atol=1e-5, rtol=1e-5), "mismatch vs reference"

    print("KERNEL_OK")
</pallas_src>

<mosaic_0001>
module attributes {stable_mosaic.version = 11 : i64} {
  func.func @_pe_kernel(%arg0: i32, %arg1: memref<2x32xf32, #tpu.memory_space<vmem>>, %arg2: memref<8x32xf32, #tpu.memory_space<vmem>>) attributes {dimension_semantics = [#tpu.dimension_semantics<parallel>], iteration_bounds = array<i64: 1>, scalar_prefetch = 0 : i64, scratch_operands = 0 : i64, tpu.core_type = #tpu.core_type<tc>, window_params = [{pipeline_mode = #tpu.pipeline_mode<synchronous>, transform_indices = @transform_0, window_bounds = array<i64: 2, 32>}, {transform_indices = @transform_1, window_bounds = array<i64: 8, 32>}]} {
    %c8_i32 = arith.constant 8 : i32
    %0 = arith.muli %arg0, %c8_i32 : i32
    %1 = tpu.iota {dimensions = array<i32: 0>} : vector<8x32xi32>
    %2 = vector.broadcast %0 : i32 to vector<8x32xi32>
    %3 = arith.addi %1, %2 : vector<8x32xi32>
    %4 = arith.sitofp %3 : vector<8x32xi32> to vector<8x32xf32>
    %c0 = arith.constant 0 : index
    %c0_0 = arith.constant 0 : index
    %5 = vector.load %arg1[%c0, %c0_0] : memref<2x32xf32, #tpu.memory_space<vmem>>, vector<1x32xf32>
    %6 = vector.broadcast %5 : vector<1x32xf32> to vector<8x32xf32>
    %7 = arith.mulf %4, %6 : vector<8x32xf32>
    %c1 = arith.constant 1 : index
    %c0_1 = arith.constant 0 : index
    %8 = vector.load %arg1[%c1, %c0_1] : memref<2x32xf32, #tpu.memory_space<vmem>>, vector<1x32xf32>
    %9 = vector.broadcast %8 : vector<1x32xf32> to vector<8x32xf32>
    %10 = arith.addf %7, %9 : vector<8x32xf32>
    %11 = math.sin %10 : vector<8x32xf32>
    %c0_2 = arith.constant 0 : index
    %c0_3 = arith.constant 0 : index
    %12 = vector.load %arg2[%c0_2, %c0_3] : memref<8x32xf32, #tpu.memory_space<vmem>>, vector<8x32xf32>
    tpu.vector_store %arg2[%c0_2, %c0_3], %11 {strides = array<i32>} : memref<8x32xf32, #tpu.memory_space<vmem>>, vector<8x32xf32>,
    return
  }
  func.func @transform_0(%arg0: i32) -> (i32, i32) {
    %c0_i32 = arith.constant 0 : i32
    %c0_i32_0 = arith.constant 0 : i32
    %c0_i32_1 = arith.constant 0 : i32
    return %c0_i32, %c0_i32_0 : i32, i32
  }
  func.func @transform_1(%arg0: i32) -> (i32, i32) {
    %c0_i32 = arith.constant 0 : i32
    %c0_i32_0 = arith.constant 0 : i32
    return %arg0, %c0_i32 : i32, i32
  }
}

</mosaic_0001>

<llo_original>
// kernel: tpu_custom_call.1
$region0: #{tpu_custom_call.1}
  #allocation0 [shape = 'u32[]', space=smem, size = 0x4, offset = 0x4, fixed_abs, tag = 'smem constant byte address 0x4 - core index']
  #allocation1 [shape = 'u32[144,128]{1,0:T(1,128)}', space=vmem, size = 0x12000, scoped, tag = 'internal scratch']
  %s0 = inlined_call_operand.hbm [shape: f32[2,32], index: 0, kind: input, shape index: {}]
  %s1 = inlined_call_operand.hbm [shape: f32[8,32], index: 1, kind: output, shape index: {}]
  %s2 = sld [smem:[#allocation0]]
  $region18: #{tpu_custom_call.1} parent=0
    _
  %s4 = ssub.s32 1, %s2
  %s5 = scalar_select 0, %s4, %s2
  $region1: #{tpu_custom_call.1} parent=0
    #allocation2 [shape = 'u8[1024]{0}', space=vmem, size = 0x400, scoped, tag = 'input window, operand 0, single buffered']
    #allocation3 [shape = 's32[1]{0}', space=sflag, size = 0x4, scoped, tag = 'scoped memory for tpu_custom_call.1']
    #allocation4 [shape = 's32[1]{0}', space=sflag, size = 0x4, scoped, tag = 'scoped memory for tpu_custom_call.1']
    #allocation5 [shape = 'u8[4096]{0}', space=vmem, size = 0x1000, scoped, tag = 'output window, operand 0, single buffered']
    %6 = vsyncpa [#allocation3], 0
    %7 = vsyncpa [#allocation4], 0
    // Predicated region
    $region2: #{tpu_custom_call.1} parent=1 // pred_check
      _
    $region3: #{tpu_custom_call.1} parent=1 // pred_check_branch
      %9 = sbr.rel (0) target = $region5
    $region4: #{tpu_custom_call.1} parent=1 // pred_region
      %s11 = ssub.s32 32, 32
      %12 = vsyncadd [#allocation3], %s11
      %s14 = sshll.u32 [#allocation2], 4
      %s15 = int_to_ptr.vmem [resolvable:$true] %s14
      %17 = dma.hbm_to_vmem [thread:$0]  %s0, 32, %s15, [#allocation3]
    $region5: #{tpu_custom_call.1} parent=1 // pred_fallthru
      _
    // Predicated region
    $region6: #{tpu_custom_call.1} parent=1 // pred_check
      _
    $region7: #{tpu_custom_call.1} parent=1 // pred_check_branch
      %19 = sbr.rel (0) target = $region9
    $region8: #{tpu_custom_call.1} parent=1 // pred_region
      %20 = dma.done [#allocation3], 32
    $region9: #{tpu_custom_call.1} parent=1 // pred_fallthru
      _
    %s21 = smul.u32 0, 8
    %v22 = vlaneseq
    %v23 = vshrl.u32 %v22, 7
    %v24 = vstv %s21
    %v25 = vadd.s32 %v23, %v24
    %v26 = vcvt.s32.f32 %v25
    %v27 = vld [vmem:[#allocation2] sm:$0x1]
    %v28 = vlaneseq
    %v29 = vshrl.u32 %v28, 7
    %v30 = vsub.s32 0, %v29
    %v31 = vrot.slane %v27, %v30
    %v32 = vmul.f32 %v26, %v31
    %v33 = vld [vmem:[#allocation2 + $0x1] sm:$0x1]
    %v34 = vlaneseq
    %v35 = vshrl.u32 %v34, 7
    %v36 = vsub.s32 0, %v35
    %v37 = vrot.slane %v33, %v36
    %v38 = vadd.f32 %v32, %v37
    %v39 = vand.u32 2147483647, %v38
    %vm40 = vcmp.le.f32.partialorder %v39, 0.7853982
    %vm41 = vcmp.lt.s32.totalorder %v38, 0
    %v42 = vand.u32 %v38, 2139095040
    %v43 = vshrl.u32 %v42, 23
    %v44 = vsub.s32 %v43, 127
    %v45 = vand.u32 2147483647, %v38
    %v46 = vand.u32 %v45, 8388607
    %v47 = vor.u32 %v46, 8388608
    %v48 = vsub.s32 0, %v47
    %v49 = vadd.s32 %v44, 1
    %vm50 = vcmp.gt.s32.totalorder %v49, 0
    %v51 = vsel %vm50, %v49, 0
    %v52 = vshrl.u32 %v51, 5
    %v53 = vand.u32 %v51, 31
    %v54 = vsub.s32 32, %v53
    %v55 = vshrl.u32 683565275, %v54
    %v56 = vshll.u32 683565275, %v53
    %v57 = vshrl.u32 2475754826, %v54
    %v58 = vor.u32 %v56, %v57
    %v59 = vshll.u32 2475754826, %v53
    %v60 = vshrl.u32 2131351028, %v54
    %v61 = vor.u32 %v59, %v60
    %v62 = vshll.u32 2131351028, %v53
    %v63 = vshrl.u32 2102212464, %v54
    %v64 = vor.u32 %v62, %v63
    %v65 = vshll.u32 2102212464, %v53
    %v66 = vshrl.u32 920167782, %v54
    %v67 = vor.u32 %v65, %v66
    %v68 = vshll.u32 920167782, %v53
    %v69 = vshrl.u32 1326507024, %v54
    %v70 = vor.u32 %v68, %v69
    %vm71 = vcmp.lt.s32.totalorder %v52, 1
    %vm72 = vcmp.lt.s32.totalorder %v52, 2
    %vm73 = vcmp.lt.s32.totalorder %v52, 3
    %vm74 = vcmp.lt.s32.totalorder %v52, 4
    %v75 = vsel %vm71, %v55, %v58
    %v76 = vsel %vm74, %v64, 2102212464
    %v77 = vsel %vm73, %v61, %v76
    %v78 = vsel %vm72, %v75, %v77
    %v79 = vsel %vm71, %v58, %v61
    %v80 = vsel %vm74, %v67, 920167782
    %v81 = vsel %vm73, %v64, %v80
    %v82 = vsel %vm72, %v79, %v81
    %v83 = vsel %vm71, %v61, %v64
    %v84 = vsel %vm74, %v70, 1326507024
    %v85 = vsel %vm73, %v67, %v84
    %v86 = vsel %vm72, %v83, %v85
    %v87 = vshll.u32 %v47, 8
    %v88 = vmul.u32.u64.compose %v87, %v86
    %v89 = vextract.low.u32 %v88
    %v90 = vextract.high.u32 %v88
    %v91 = vmul.u32.u64.compose %v87, %v82
    %v92 = vextract.low.u32 %v91
    %v93 = vextract.high.u32 %v91
    %v94 = vmul.u32 %v87, %v78
    %v95 = vadd.s32 %v90, %v92
    %vm96 = vc.u32 %v90, %v92
    %v97 = vadd.s32 %v93, 1
    %v98 = vsel %vm96, %v97, %v93
    %v99 = vadd.s32 %v94, %v98
    %v100 = vadd.s32 %v99, 536870912
    %v101 = vshrl.u32 %v100, 30
    %v102 = vshll.u32 %v101, 30
    %v103 = vsub.s32 %v99, %v102
    %vm104 = vcmp.lt.s32.totalorder %v103, 0
    %v105 = vsub.s32 0, %v103
    %v106 = vsel %vm104, %v105, %v103
    %v107 = vclz %v106
    %v108 = vsub.s32 %v107, 2
    %vm109 = vcmp.gt.s32.totalorder 0, %v108
    %v110 = vsel %vm109, 0, %v108
    %v111 = vsub.s32 32, %v110
    %v112 = vshll.u32 %v103, %v110
    %v113 = vshrl.u32 %v95, %v111
    %v114 = vor.u32 %v112, %v113
    %v115 = vsub.s32 4294967266, %v110
    %v116 = vadd.s32 %v115, 127
    %v117 = vshll.u32 %v116, 23
    %v118 = vor.u32 4788187, %v117
    %v119 = vand.u32 2147483647, %v118
    %v121 = vcvt.s32.f32 %v114
    %v122 = vmul.f32 %v121, %v119
    %v123 = vxor.u32 %v122, 2147483648
    %v124 = vsel %vm41, %v123, %v122
    %v125 = vsub.s32 4, %v101
    %v126 = vsel %vm41, %v125, %v101
    %v127 = vsel %vm40, %v38, %v124
    %v128 = vsel %vm40, 0, %v126
    %v129 = vcosq.f32.pop %v127
    %v130 = vsinq.f32.pop %v127
    %vm131 = vweird.f32 %v38
    %v132 = vadd.s32 %v128, 3
    %v133 = vand.u32 %v132, 3
    %vm134 = vcmp.lt.s32.totalorder %v133, 2
    %vm135 = vcmp.eq.s32.totalorder %v133, 0
    %v136 = vxor.u32 %v130, 2147483648
    %v137 = vsel %vm135, %v129, %v136
    %vm138 = vcmp.eq.s32.totalorder %v133, 2
    %v139 = vxor.u32 %v129, 2147483648
    %v140 = vsel %vm138, %v139, %v130
    %v141 = vsel %vm134, %v137, %v140
    %v142 = vsel %vm131, nan, %v141
    %vm143 = vcmask 261120
    %144 = vst.msk [vmem:[#allocation5] sm:$0xff] %vm143, %v142
    // Predicated region
    $region10: #{tpu_custom_call.1} parent=1 // pred_check
      _
    $region11: #{tpu_custom_call.1} parent=1 // pred_check_branch
      %146 = sbr.rel (0) target = $region13
    $region12: #{tpu_custom_call.1} parent=1 // pred_region
      %s148 = ssub.s32 128, 128
      %149 = vsyncadd [#allocation4], %s148
      %s151 = sshll.u32 [#allocation5], 4
      %s152 = int_to_ptr.vmem [resolvable:$true] %s151
      %154 = dma.vmem_to_hbm [thread:$0]  %s152, 128, %s1, [#allocation4]
    $region13: #{tpu_custom_call.1} parent=1 // pred_fallthru
      _
    // Predicated region
    $region14: #{tpu_custom_call.1} parent=1 // pred_check
      _
    $region15: #{tpu_custom_call.1} parent=1 // pred_check_branch
      %156 = sbr.rel (0) target = $region17
    $region16: #{tpu_custom_call.1} parent=1 // pred_region
      %157 = dma.done [#allocation4], 128
    $region17: #{tpu_custom_call.1} parent=1 // pred_fallthru
      _
    %158 = vsyncpa [#allocation3], 1
    %159 = vsyncpa [#allocation4], 1

</llo_original>
